<compile_context>
chip_gen: v5e
topology: v5e:2x2
jax: 0.10.0
libtpu: 0.0.40
codegen_flags: <defaults>
</compile_context>

<pallas_src>
import jax
import jax.numpy as jnp
from jax.experimental import pallas as pl
from jax.experimental.pallas import tpu as pltpu  # noqa: F401  (TPU backend)

# Layer dims of TestDummyModel: 8 -> 16 -> 32 -> 64 -> 8
_DIMS = [(8, 16), (16, 32), (32, 64), (64, 8)]
_PAD = 64               # all fan-in / fan-out padded to 64
_BLK_ROWS = _PAD + 8    # 64 weight rows + 8 rows (row 64 = bias, rest zero)


def pack_params(params):
    """Pack the 4 (w, b) pairs into one lane-dense (2, 72, 128) f32 slab.

    Layer l lives in block l // 2, lanes (l % 2)*64 : (l % 2)*64 + 64:
      rows 0:fan_in hold the weight (stored as (in, out) so the kernel
      computes x @ W), row 64 holds the bias, everything else is zero.
    Zero padding keeps the padded matmul chain exact (padded activation lanes
    stay 0 through bias-add and ReLU).  Call once; reuse across forwards.
    """
    slab = jnp.zeros((2, _BLK_ROWS, 2 * _PAD), jnp.float32)
    for l, ((w, b), (fan_in, fan_out)) in enumerate(zip(params, _DIMS)):
        blk, lane0 = l // 2, (l % 2) * _PAD
        slab = slab.at[blk, :fan_in, lane0:lane0 + fan_out].set(
            w.astype(jnp.float32))
        slab = slab.at[blk, _PAD, lane0:lane0 + fan_out].set(
            b.reshape(-1).astype(jnp.float32))
    return slab  # (2, 72, 128)


def mlp_kernel(x_ref, p_ref, o_ref):
    x = x_ref[...]  # (8, 8)

    def layer(h, l, relu):
        # Full lane-dense (72, 128) block load, then static 64-lane slice.
        blk_full = p_ref[l // 2]                       # (72, 128)
        lane0 = (l % 2) * _PAD
        blk = blk_full[:, lane0:lane0 + _PAD]          # (72, 64) this layer
        w = blk[: h.shape[1], :]                       # (h_width, 64) weight
        b = blk[_PAD:_PAD + 1, :]                      # (1, 64) bias
        y = jnp.dot(h, w, preferred_element_type=jnp.float32) + b
        return jnp.maximum(y, 0.0) if relu else y

    h = layer(x, 0, relu=True)    # net1: Linear(8,16)  + ReLU  (padded to 64 lanes)
    h = layer(h, 1, relu=True)    # net2: Linear(16,32) + ReLU
    h = layer(h, 2, relu=False)   # net3: Linear(32,64)         (no activation)
    h = jnp.maximum(h, 0.0)       # net4: ReLU
    h = layer(h, 3, relu=False)   #       Linear(64,8)   (lanes 8:64 are exactly 0)

    o_ref[...] = h[:, :8].astype(o_ref.dtype)


@jax.jit
def dummy_model_forward(x, packed_params):
    batch = x.shape[0]
    out_dim = _DIMS[-1][1]

    full = lambda shape: pl.BlockSpec(shape, lambda: (0,) * len(shape))

    # Logical (unpadded) FLOPs: 2 * sum(M * K * N) over the 4 layers.
    flops = 2 * sum(batch * k * n for (k, n) in _DIMS)
    cost = pl.CostEstimate(
        flops=flops,
        transcendentals=0,
        bytes_accessed=int(x.size * 4 + packed_params.size * 4
                           + batch * out_dim * 4),
    )

    return pl.pallas_call(
        mlp_kernel,
        out_shape=jax.ShapeDtypeStruct((batch, out_dim), jnp.float32),
        grid=(),
        in_specs=[full(x.shape), full(packed_params.shape)],
        out_specs=full((batch, out_dim)),
        cost_estimate=cost,
    )(x, packed_params)


def init_params(key):
    """Deterministic init mimicking torch.nn.Linear default (uniform +/- 1/sqrt(fan_in))."""
    params = []
    for (fan_in, fan_out) in _DIMS:
        key, kw, kb = jax.random.split(key, 3)
        bound = 1.0 / jnp.sqrt(fan_in)
        w = jax.random.uniform(kw, (fan_in, fan_out), jnp.float32, -bound, bound)
        b = jax.random.uniform(kb, (1, fan_out), jnp.float32, -bound, bound)
        params.append((w, b))
    return params


def reference_forward(x, params):
    (w1, b1), (w2, b2), (w3, b3), (w4, b4) = params
    h = jnp.maximum(x @ w1 + b1, 0.0)
    h = jnp.maximum(h @ w2 + b2, 0.0)
    h = h @ w3 + b3
    h = jnp.maximum(h, 0.0)
    return h @ w4 + b4


if __name__ == "__main__":
    key = jax.random.PRNGKey(0)
    key, kx = jax.random.split(key)
    # get_input() -> torch.rand(8, 8): uniform [0, 1), shape (8, 8)
    x = jax.random.uniform(kx, (8, 8), jnp.float32)

    params = init_params(key)
    packed = jax.block_until_ready(pack_params(params))  # one-time packing

    out = jax.block_until_ready(dummy_model_forward(x, packed))
    ref = jax.block_until_ready(reference_forward(x, params))

    assert out.shape == (8, 8), out.shape
    assert jnp.allclose(out, ref, atol=1e-5, rtol=1e-5), "mismatch vs reference"

    print("KERNEL_OK")
</pallas_src>

<mosaic_0001>
module attributes {stable_mosaic.version = 11 : i64} {
  func.func @mlp_kernel(%arg0: memref<8x8xf32, #tpu.memory_space<vmem>>, %arg1: memref<2x72x128xf32, #tpu.memory_space<vmem>>, %arg2: memref<8x8xf32, #tpu.memory_space<vmem>>) attributes {dimension_semantics = [], scalar_prefetch = 0 : i64, scratch_operands = 0 : i64, tpu.core_type = #tpu.core_type<tc>} {
    %c0 = arith.constant 0 : index
    %c0_0 = arith.constant 0 : index
    %0 = vector.load %arg0[%c0, %c0_0] : memref<8x8xf32, #tpu.memory_space<vmem>>, vector<8x8xf32>
    %c0_1 = arith.constant 0 : index
    %c0_2 = arith.constant 0 : index
    %c0_3 = arith.constant 0 : index
    %1 = vector.load %arg1[%c0_1, %c0_2, %c0_3] : memref<2x72x128xf32, #tpu.memory_space<vmem>>, vector<1x72x128xf32>
    %2 = vector.shape_cast %1 : vector<1x72x128xf32> to vector<72x128xf32>
    %3 = vector.extract_strided_slice %2 {offsets = [0, 0], sizes = [72, 64], strides = [1, 1]} : vector<72x128xf32> to vector<72x64xf32>
    %4 = vector.extract_strided_slice %3 {offsets = [0, 0], sizes = [8, 64], strides = [1, 1]} : vector<72x64xf32> to vector<8x64xf32>
    %5 = vector.extract_strided_slice %3 {offsets = [64, 0], sizes = [1, 64], strides = [1, 1]} : vector<72x64xf32> to vector<1x64xf32>
    %cst = arith.constant dense<0.000000e+00> : vector<8x64xf32>
    %6 = tpu.matmul %0, %4, %cst {dimension_numbers = #tpu.dot_dimension_numbers<[1], [0], [0], [1], [0, 0, 1, 1], [], []>} : vector<8x8xf32>, vector<8x64xf32>, vector<8x64xf32> -> vector<8x64xf32>
    %7 = vector.broadcast %5 : vector<1x64xf32> to vector<8x64xf32>
    %8 = arith.addf %6, %7 : vector<8x64xf32>
    %cst_4 = arith.constant 0.000000e+00 : f32
    %9 = vector.broadcast %cst_4 : f32 to vector<8x64xf32>
    %10 = arith.maximumf %8, %9 : vector<8x64xf32>
    %c0_5 = arith.constant 0 : index
    %c0_6 = arith.constant 0 : index
    %c0_7 = arith.constant 0 : index
    %11 = vector.load %arg1[%c0_5, %c0_6, %c0_7] : memref<2x72x128xf32, #tpu.memory_space<vmem>>, vector<1x72x128xf32>
    %12 = vector.shape_cast %11 : vector<1x72x128xf32> to vector<72x128xf32>
    %13 = vector.extract_strided_slice %12 {offsets = [0, 64], sizes = [72, 64], strides = [1, 1]} : vector<72x128xf32> to vector<72x64xf32>
    %14 = vector.extract_strided_slice %13 {offsets = [0, 0], sizes = [64, 64], strides = [1, 1]} : vector<72x64xf32> to vector<64x64xf32>
    %15 = vector.extract_strided_slice %13 {offsets = [64, 0], sizes = [1, 64], strides = [1, 1]} : vector<72x64xf32> to vector<1x64xf32>
    %cst_8 = arith.constant dense<0.000000e+00> : vector<8x64xf32>
    %16 = tpu.matmul %10, %14, %cst_8 {dimension_numbers = #tpu.dot_dimension_numbers<[1], [0], [0], [1], [0, 0, 1, 1], [], []>} : vector<8x64xf32>, vector<64x64xf32>, vector<8x64xf32> -> vector<8x64xf32>
    %17 = vector.broadcast %15 : vector<1x64xf32> to vector<8x64xf32>
    %18 = arith.addf %16, %17 : vector<8x64xf32>
    %cst_9 = arith.constant 0.000000e+00 : f32
    %19 = vector.broadcast %cst_9 : f32 to vector<8x64xf32>
    %20 = arith.maximumf %18, %19 : vector<8x64xf32>
    %c1 = arith.constant 1 : index
    %c0_10 = arith.constant 0 : index
    %c0_11 = arith.constant 0 : index
    %21 = vector.load %arg1[%c1, %c0_10, %c0_11] : memref<2x72x128xf32, #tpu.memory_space<vmem>>, vector<1x72x128xf32>
    %22 = vector.shape_cast %21 : vector<1x72x128xf32> to vector<72x128xf32>
    %23 = vector.extract_strided_slice %22 {offsets = [0, 0], sizes = [72, 64], strides = [1, 1]} : vector<72x128xf32> to vector<72x64xf32>
    %24 = vector.extract_strided_slice %23 {offsets = [0, 0], sizes = [64, 64], strides = [1, 1]} : vector<72x64xf32> to vector<64x64xf32>
    %25 = vector.extract_strided_slice %23 {offsets = [64, 0], sizes = [1, 64], strides = [1, 1]} : vector<72x64xf32> to vector<1x64xf32>
    %cst_12 = arith.constant dense<0.000000e+00> : vector<8x64xf32>
    %26 = tpu.matmul %20, %24, %cst_12 {dimension_numbers = #tpu.dot_dimension_numbers<[1], [0], [0], [1], [0, 0, 1, 1], [], []>} : vector<8x64xf32>, vector<64x64xf32>, vector<8x64xf32> -> vector<8x64xf32>
    %27 = vector.broadcast %25 : vector<1x64xf32> to vector<8x64xf32>
    %28 = arith.addf %26, %27 : vector<8x64xf32>
    %cst_13 = arith.constant 0.000000e+00 : f32
    %29 = vector.broadcast %cst_13 : f32 to vector<8x64xf32>
    %30 = arith.maximumf %28, %29 : vector<8x64xf32>
    %c1_14 = arith.constant 1 : index
    %c0_15 = arith.constant 0 : index
    %c0_16 = arith.constant 0 : index
    %31 = vector.load %arg1[%c1_14, %c0_15, %c0_16] : memref<2x72x128xf32, #tpu.memory_space<vmem>>, vector<1x72x128xf32>
    %32 = vector.shape_cast %31 : vector<1x72x128xf32> to vector<72x128xf32>
    %33 = vector.extract_strided_slice %32 {offsets = [0, 64], sizes = [72, 64], strides = [1, 1]} : vector<72x128xf32> to vector<72x64xf32>
    %34 = vector.extract_strided_slice %33 {offsets = [0, 0], sizes = [64, 64], strides = [1, 1]} : vector<72x64xf32> to vector<64x64xf32>
    %35 = vector.extract_strided_slice %33 {offsets = [64, 0], sizes = [1, 64], strides = [1, 1]} : vector<72x64xf32> to vector<1x64xf32>
    %cst_17 = arith.constant dense<0.000000e+00> : vector<8x64xf32>
    %36 = tpu.matmul %30, %34, %cst_17 {dimension_numbers = #tpu.dot_dimension_numbers<[1], [0], [0], [1], [0, 0, 1, 1], [], []>} : vector<8x64xf32>, vector<64x64xf32>, vector<8x64xf32> -> vector<8x64xf32>
    %37 = vector.broadcast %35 : vector<1x64xf32> to vector<8x64xf32>
    %38 = arith.addf %36, %37 : vector<8x64xf32>
    %39 = vector.extract_strided_slice %38 {offsets = [0, 0], sizes = [8, 8], strides = [1, 1]} : vector<8x64xf32> to vector<8x8xf32>
    %c0_18 = arith.constant 0 : index
    %c0_19 = arith.constant 0 : index
    %40 = vector.load %arg2[%c0_18, %c0_19] : memref<8x8xf32, #tpu.memory_space<vmem>>, vector<8x8xf32>
    tpu.vector_store %arg2[%c0_18, %c0_19], %39 {strides = array<i32>} : memref<8x8xf32, #tpu.memory_space<vmem>>, vector<8x8xf32>,
    return
  }
}

</mosaic_0001>

<llo_original>
// kernel: dummy_model_forward.1
$region0: #{dummy_model_forward.1}
  #allocation0 [shape = 'u32[]', space=smem, size = 0x4, offset = 0x4, fixed_abs, tag = 'smem constant byte address 0x4 - core index']
  #allocation1 [shape = 'u32[72,128]{1,0:T(1,128)}', space=vmem, size = 0x9000, scoped, tag = 'internal scratch']
  %s0 = inlined_call_operand.hbm [shape: f32[8,8], index: 0, kind: input, shape index: {}]
  %s1 = inlined_call_operand.hbm [shape: f32[2,72,128], index: 1, kind: input, shape index: {}]
  %s2 = inlined_call_operand.hbm [shape: f32[8,8], index: 2, kind: output, shape index: {}]
  %s3 = sld [smem:[#allocation0]]
  $region26: #{dummy_model_forward.1} parent=0
    _
  %s5 = ssub.s32 1, %s3
  %s6 = scalar_select 0, %s5, %s3
  $region1: #{dummy_model_forward.1} parent=0
    #allocation2 [shape = 'u8[4096]{0}', space=vmem, size = 0x1000, scoped, tag = 'input window, operand 0, single buffered']
    #allocation3 [shape = 's32[1]{0}', space=sflag, size = 0x4, scoped, tag = 'scoped memory for dummy_model_forward.1']
    #allocation4 [shape = 's32[1]{0}', space=sflag, size = 0x4, scoped, tag = 'scoped memory for dummy_model_forward.1']
    #allocation5 [shape = 'u8[73728]{0}', space=vmem, size = 0x12000, scoped, tag = 'input window, operand 1, single buffered']
    #allocation6 [shape = 's32[1]{0}', space=sflag, size = 0x4, scoped, tag = 'scoped memory for dummy_model_forward.1']
    #allocation7 [shape = 'u8[4096]{0}', space=vmem, size = 0x1000, scoped, tag = 'output window, operand 0, single buffered']
    %7 = vsyncpa [#allocation3], 0
    %8 = vsyncpa [#allocation6], 0
    %9 = vsyncpa [#allocation4], 0
    // Predicated region
    $region2: #{dummy_model_forward.1} parent=1 // pred_check
      _
    $region3: #{dummy_model_forward.1} parent=1 // pred_check_branch
      %11 = sbr.rel (0) target = $region5
    $region4: #{dummy_model_forward.1} parent=1 // pred_region
      %13 = vsyncadd [#allocation3], 0
      %s15 = sshll.u32 %s0, 4
      %s16 = int_to_ptr.hbm [resolvable:$true] %s15
      %s17 = sshll.u32 [#allocation2], 4
      %s18 = int_to_ptr.vmem [resolvable:$true] %s17
      %20 = dma.hbm_to_vmem [thread:$0]  %s16, 128, %s18, [#allocation3]
    $region5: #{dummy_model_forward.1} parent=1 // pred_fallthru
      _
    // Predicated region
    $region6: #{dummy_model_forward.1} parent=1 // pred_check
      _
    $region7: #{dummy_model_forward.1} parent=1 // pred_check_branch
      %22 = sbr.rel (0) target = $region9
    $region8: #{dummy_model_forward.1} parent=1 // pred_region
      %24 = vsyncadd [#allocation6], 0
      %s25 = sshll.u32 %s1, 4
      %s26 = int_to_ptr.hbm [resolvable:$true] %s25
      %s27 = sshll.u32 [#allocation5], 4
      %s28 = int_to_ptr.vmem [resolvable:$true] %s27
      %33 = dma.hbm_to_vmem [thread:$0]  %s26, 2304, %s28, [#allocation6], 128, 128, 8
    $region9: #{dummy_model_forward.1} parent=1 // pred_fallthru
      _
    // Predicated region
    $region10: #{dummy_model_forward.1} parent=1 // pred_check
      _
    $region11: #{dummy_model_forward.1} parent=1 // pred_check_branch
      %35 = sbr.rel (0) target = $region13
    $region12: #{dummy_model_forward.1} parent=1 // pred_region
      %37 = dma.done [#allocation3], 128
    $region13: #{dummy_model_forward.1} parent=1 // pred_fallthru
      _
    // Predicated region
    $region14: #{dummy_model_forward.1} parent=1 // pred_check
      _
    $region15: #{dummy_model_forward.1} parent=1 // pred_check_branch
      %39 = sbr.rel (0) target = $region17
    $region16: #{dummy_model_forward.1} parent=1 // pred_region
      %41 = dma.done [#allocation6], 2304
    $region17: #{dummy_model_forward.1} parent=1 // pred_fallthru
      _
    %v42 = vld [vmem:[#allocation2] sm:$0xff]
    %v43 = vld [vmem:[#allocation5] sm:$0xff]
    %v44 = vld [vmem:[#allocation5 + $0x8] sm:$0xff]
    %v45 = vld [vmem:[#allocation5 + $0x10] sm:$0xff]
    %v46 = vld [vmem:[#allocation5 + $0x18] sm:$0xff]
    %v47 = vld [vmem:[#allocation5 + $0x20] sm:$0xff]
    %v48 = vld [vmem:[#allocation5 + $0x28] sm:$0xff]
    %v49 = vld [vmem:[#allocation5 + $0x30] sm:$0xff]
    %v50 = vld [vmem:[#allocation5 + $0x38] sm:$0xff]
    %v51 = vld [vmem:[#allocation5 + $0x40] sm:$0xff]
    %v52 = vperm.slane %v51, 0
    %vm53 = vcmask 64512
    %v55 = vsel %vm53, %v42, 0
    %57 = vmatpush.msra.mxu0 0.0
    %58 = vmatpush.msra.mxu0 0.0
    %59 = vmatpush.msra.mxu0 0.0
    %60 = vmatpush.msra.mxu0 0.0
    %61 = vmatpush.msra.mxu0 0.0
    %62 = vmatpush.msra.mxu0 0.0
    %63 = vmatpush.msra.mxu0 0.0
    %64 = vmatpush.msra.mxu0 0.0
    %65 = vmatpush.msra.mxu0 0.0
    %66 = vmatpush.msra.mxu0 0.0
    %67 = vmatpush.msra.mxu0 0.0
    %68 = vmatpush.msra.mxu0 0.0
    %69 = vmatpush.msra.mxu0 0.0
    %70 = vmatpush.msra.mxu0 0.0
    %71 = vmatpush.msra.mxu0 0.0
    %72 = vmatpush.msra.mxu0 %v43
    %73 = vmatmul.f32.gmra.mxu0 %v55
    %v74 = vpop.f32.mrf.mxu0
    %v75 = vadd.f32 %v52, %v74
    %76 = vdwg.mxu0
    %v77 = vmax.f32 %v75, 0.0
    %86 = vrot.lane.b32.xlu0 %v43, 64
    %v87 = vpop.permute.xlu0 %86
    %88 = vrot.lane.b32.xlu0 %v44, 64
    %v89 = vpop.permute.xlu0 %88
    %90 = vrot.lane.b32.xlu0 %v45, 64
    %v91 = vpop.permute.xlu0 %90
    %92 = vrot.lane.b32.xlu0 %v46, 64
    %v93 = vpop.permute.xlu0 %92
    %94 = vrot.lane.b32.xlu0 %v47, 64
    %v95 = vpop.permute.xlu0 %94
    %96 = vrot.lane.b32.xlu0 %v48, 64
    %v97 = vpop.permute.xlu0 %96
    %98 = vrot.lane.b32.xlu0 %v49, 64
    %v99 = vpop.permute.xlu0 %98
    %100 = vrot.lane.b32.xlu0 %v50, 64
    %v101 = vpop.permute.xlu0 %100
    %111 = vrot.lane.b32.xlu0 %v52, 64
    %v112 = vpop.permute.xlu0 %111
    %vm114 = vcmask 523264
    %v116 = vsel %vm114, %v77, 0
    %118 = vmatpush.msra.mxu0 0.0
    %119 = vmatpush.msra.mxu0 0.0
    %120 = vmatpush.msra.mxu0 0.0
    %121 = vmatpush.msra.mxu0 0.0
    %122 = vmatpush.msra.mxu0 0.0
    %123 = vmatpush.msra.mxu0 0.0
    %124 = vmatpush.msra.mxu0 0.0
    %125 = vmatpush.msra.mxu0 0.0
    %126 = vmatpush.msra.mxu0 %v101
    %127 = vmatpush.msra.mxu0 %v99
    %128 = vmatpush.msra.mxu0 %v97
    %129 = vmatpush.msra.mxu0 %v95
    %130 = vmatpush.msra.mxu0 %v93
    %131 = vmatpush.msra.mxu0 %v91
    %132 = vmatpush.msra.mxu0 %v89
    %133 = vmatpush.msra.mxu0 %v87
    %134 = vmatmul.f32.gmra.mxu0 %v116
    %v135 = vpop.f32.mrf.mxu0
    %v136 = vadd.f32 %v112, %v135
    %137 = vdwg.mxu0
    %v138 = vmax.f32 %v136, 0.0
    %s139 = scalar_lea.vmem [#allocation5], 72
    %v140 = vld [vmem:[%s139] sm:$0xff]
    %v141 = vld [vmem:[%s139 + $0x8] sm:$0xff]
    %v142 = vld [vmem:[%s139 + $0x10] sm:$0xff]
    %v143 = vld [vmem:[%s139 + $0x18] sm:$0xff]
    %v144 = vld [vmem:[%s139 + $0x20] sm:$0xff]
    %v145 = vld [vmem:[%s139 + $0x28] sm:$0xff]
    %v146 = vld [vmem:[%s139 + $0x30] sm:$0xff]
    %v147 = vld [vmem:[%s139 + $0x38] sm:$0xff]
    %v148 = vld [vmem:[%s139 + $0x40] sm:$0xff]
    %v149 = vperm.slane %v148, 0
    %v151 = vsel %vm114, %v138, 0
    %153 = vmatpush.msra.mxu0 0.0
    %154 = vmatpush.msra.mxu0 0.0
    %155 = vmatpush.msra.mxu0 0.0
    %156 = vmatpush.msra.mxu0 0.0
    %157 = vmatpush.msra.mxu0 0.0
    %158 = vmatpush.msra.mxu0 0.0
    %159 = vmatpush.msra.mxu0 0.0
    %160 = vmatpush.msra.mxu0 0.0
    %161 = vmatpush.msra.mxu0 %v147
    %162 = vmatpush.msra.mxu0 %v146
    %163 = vmatpush.msra.mxu0 %v145
    %164 = vmatpush.msra.mxu0 %v144
    %165 = vmatpush.msra.mxu0 %v143
    %166 = vmatpush.msra.mxu0 %v142
    %167 = vmatpush.msra.mxu0 %v141
    %168 = vmatpush.msra.mxu0 %v140
    %169 = vmatmul.f32.gmra.mxu0 %v151
    %v170 = vpop.f32.mrf.mxu0
    %v171 = vadd.f32 %v149, %v170
    %172 = vdwg.mxu0
    %v173 = vmax.f32 %v171, 0.0
    %182 = vrot.lane.b32.xlu0 %v140, 64
    %v183 = vpop.permute.xlu0 %182
    %184 = vrot.lane.b32.xlu0 %v141, 64
    %v185 = vpop.permute.xlu0 %184
    %186 = vrot.lane.b32.xlu0 %v142, 64
    %v187 = vpop.permute.xlu0 %186
    %188 = vrot.lane.b32.xlu0 %v143, 64
    %v189 = vpop.permute.xlu0 %188
    %190 = vrot.lane.b32.xlu0 %v144, 64
    %v191 = vpop.permute.xlu0 %190
    %192 = vrot.lane.b32.xlu0 %v145, 64
    %v193 = vpop.permute.xlu0 %192
    %194 = vrot.lane.b32.xlu0 %v146, 64
    %v195 = vpop.permute.xlu0 %194
    %196 = vrot.lane.b32.xlu0 %v147, 64
    %v197 = vpop.permute.xlu0 %196
    %207 = vrot.lane.b32.xlu0 %v149, 64
    %v208 = vpop.permute.xlu0 %207
    %v211 = vsel %vm114, %v173, 0
    %213 = vmatpush.msra.mxu0 0.0
    %214 = vmatpush.msra.mxu0 0.0
    %215 = vmatpush.msra.mxu0 0.0
    %216 = vmatpush.msra.mxu0 0.0
    %217 = vmatpush.msra.mxu0 0.0
    %218 = vmatpush.msra.mxu0 0.0
    %219 = vmatpush.msra.mxu0 0.0
    %220 = vmatpush.msra.mxu0 0.0
    %221 = vmatpush.msra.mxu0 %v197
    %222 = vmatpush.msra.mxu0 %v195
    %223 = vmatpush.msra.mxu0 %v193
    %224 = vmatpush.msra.mxu0 %v191
    %225 = vmatpush.msra.mxu0 %v189
    %226 = vmatpush.msra.mxu0 %v187
    %227 = vmatpush.msra.mxu0 %v185
    %228 = vmatpush.msra.mxu0 %v183
    %229 = vmatmul.f32.gmra.mxu0 %v211
    %v230 = vpop.f32.mrf.mxu0
    %v231 = vadd.f32 %v208, %v230
    %232 = vdwg.mxu0
    %233 = vst.msk [vmem:[#allocation7] sm:$0xff] %vm53, %v231
    // Predicated region
    $region18: #{dummy_model_forward.1} parent=1 // pred_check
      _
    $region19: #{dummy_model_forward.1} parent=1 // pred_check_branch
      %235 = sbr.rel (0) target = $region21
    $region20: #{dummy_model_forward.1} parent=1 // pred_region
      %237 = vsyncadd [#allocation4], 0
      %s239 = sshll.u32 [#allocation7], 4
      %s240 = int_to_ptr.vmem [resolvable:$true] %s239
      %s241 = sshll.u32 %s2, 4
      %s242 = int_to_ptr.hbm [resolvable:$true] %s241
      %244 = dma.vmem_to_hbm [thread:$0]  %s240, 128, %s242, [#allocation4]
    $region21: #{dummy_model_forward.1} parent=1 // pred_fallthru
      _
    // Predicated region
    $region22: #{dummy_model_forward.1} parent=1 // pred_check
      _
    $region23: #{dummy_model_forward.1} parent=1 // pred_check_branch
      %246 = sbr.rel (0) target = $region25
    $region24: #{dummy_model_forward.1} parent=1 // pred_region
      %248 = dma.done [#allocation4], 128
    $region25: #{dummy_model_forward.1} parent=1 // pred_fallthru
      _
    %249 = vsyncpa [#allocation3], 1
    %250 = vsyncpa [#allocation6], 1
    %251 = vsyncpa [#allocation4], 1

</llo_original>
